<compile_context>
chip_gen: v5e
topology: v5e:2x2
jax: 0.10.0
libtpu: 0.0.40
codegen_flags: <defaults>
</compile_context>

<pallas_src>
import functools

import jax
import jax.numpy as jnp
from jax.experimental import pallas as pl
from jax.experimental.pallas import tpu as pltpu

# ------------------------- model configuration -------------------------------
B = 2            # batch
LATENT = 8       # latent_dim
HIDDEN = 32      # hidden_dim
H, W = 16, 16    # out_dim
C_OUT = 1        # len(out_dim) == 2  ->  c = 1
LRELU_A = 0.1    # kwargs.get('lrelu_a', 0.1)
KH = KW = 3      # ConvBlock kernel size
TAPS = KH * KW
HW = H * W
Q = B * HW       # flattened (batch, y, x) positions -> 128-lane axis
CENTER = TAPS // 2


def _tap_offsets():
    return [((k // KW) - 1, (k % KW) - 1) for k in range(TAPS)]


def _tap_shifts(like_jnp: bool = True):
    """Static per-tap lane shifts. jnp.roll convention: out[q] = x[(q - shift) % Q],
    and we need out[q] = x[q + delta]  =>  shift = (-delta) % Q."""
    shifts = []
    for dy, dx in _tap_offsets():
        delta = dy * W + dx
        shifts.append(((-delta) % Q) if like_jnp else (delta % Q))
    return tuple(shifts)


# --------- one-time setup check of the pltpu.roll direction (review #7) -------
# Hard-coded convention: pltpu.roll follows jnp.roll.  The probe below is a setup-time
# unit check (run once in __main__, outside the forward path); its result is baked into
# static Python shift constants, so the compiled forward kernel never depends on it.
def _roll_probe_kernel(x_ref, o_ref):
    o_ref[...] = pltpu.roll(x_ref[...], 1, axis=1)


@functools.lru_cache(maxsize=None)
def _roll_like_jnp() -> bool:
    x = jnp.arange(8 * 256, dtype=jnp.float32).reshape(8, 256)
    y = pl.pallas_call(
        _roll_probe_kernel,
        out_shape=jax.ShapeDtypeStruct((8, 256), jnp.float32),
    )(x)
    return bool(jnp.array_equal(y, jnp.roll(x, 1, axis=1)))


# ------------------------------ fused kernel ----------------------------------
def _fused_decoder_kernel(z_ref, b3_ref, mask_ref, afc_ref, w1_ref, b1_ref,
                          w2_ref, b2_ref, w3_ref, o_ref, x_scr, x9_scr,
                          *, tap_shifts):
    # ---- fc_linear (bias-free), fused with the (B, hidden, H, W) reshape ------
    # X^T[c, b*HW + p] = sum_l z[b, l] * fc_w[c*HW + p, l]
    # No zeros-init (start from the l=0 term); batch halves go straight into a
    # (HIDDEN, Q) VMEM scratch (no lane-axis concatenate).
    for b in range(B):
        xb = z_ref[b, 0] * afc_ref[0]
        for l in range(1, LATENT):
            xb = xb + z_ref[b, l] * afc_ref[l]
        x_scr[:, pl.ds(b * HW, HW)] = xb

    # ---- ConvBlock layer: roll/mask the 32-channel input, ONE K=288 matmul -----
    def conv3x3_lrelu(x_t, w_ref, b_ref):
        for k in range(TAPS):
            if k == CENTER:
                slab = x_t                                     # no shift, all-ones mask
            else:
                slab = pltpu.roll(x_t, tap_shifts[k], axis=1)  # XLU lane rotation
                slab = slab * mask_ref[pl.ds(k, 1), :]         # (1, Q) zero-pad mask
            x9_scr[pl.ds(k * HIDDEN, HIDDEN), :] = slab
        # (HIDDEN, 9*HIDDEN) @ (9*HIDDEN, Q): single MXU matmul per layer (batch folded
        # into N=Q=512, contraction K=288).
        acc = jnp.dot(w_ref[...], x9_scr[...], preferred_element_type=jnp.float32)
        acc = acc + b_ref[...]                                 # (HIDDEN, 1) bias broadcast
        return jnp.where(acc >= 0.0, acc, LRELU_A * acc)       # LeakyReLU(0.1)

    h = conv3x3_lrelu(x_scr[...], w1_ref, b1_ref)              # decoder layer 1
    h = conv3x3_lrelu(h, w2_ref, b2_ref)                       # decoder layer 2

    # ---- conv_1x1 head (C_OUT == 1): VPU multiply + sublane reduce -------------
    o_ref[...] = jnp.sum(h * w3_ref[...], axis=0, keepdims=True) + b3_ref[0]


# ------------------------- one-time parameter packing --------------------------
def _make_tap_masks():
    """Per-tap, per-output-position zero-padding masks, (TAPS, Q) f32 (~18 KiB).
    Precomputed host-side so the kernel loads one (1, Q) row per tap instead of
    building / keeping 9 full (HIDDEN, Q) boolean masks live."""
    q = jnp.arange(Q)
    p = q % HW
    yi, xj = p // W, p % W
    rows = []
    for dy, dx in _tap_offsets():
        rows.append((yi + dy >= 0) & (yi + dy < H) & (xj + dx >= 0) & (xj + dx < W))
    return jnp.stack(rows).astype(jnp.float32)


def pack_params(params):
    """PyTorch-layout -> kernel-layout repack; hoisted out of the forward path.
    (For v6e/v7x-only deployments, casting afc / w*t to bf16 here halves the weight
    DMA; kept f32 for v5e VPU compatibility and the 1e-4 check.)"""
    fc_w, w1, b1, w2, b2, w3, b3 = params
    f32 = jnp.float32
    # fc weight (HIDDEN*HW, LATENT) with out index c*HW + p  ->  (LATENT, HIDDEN, HW)
    afc = jnp.asarray(fc_w, f32).T.reshape(LATENT, HIDDEN, HW)

    def tap_pack_t(w):
        # OIHW (co, ci, ky, kx) -> (co, ky, kx, ci) -> (HIDDEN, TAPS*HIDDEN)
        # column index = (ky*KW + kx)*HIDDEN + ci, matching the X9 row stacking.
        return jnp.transpose(jnp.asarray(w, f32), (0, 2, 3, 1)).reshape(HIDDEN, TAPS * HIDDEN)

    return (afc,
            tap_pack_t(w1), jnp.asarray(b1, f32).reshape(HIDDEN, 1),
            tap_pack_t(w2), jnp.asarray(b2, f32).reshape(HIDDEN, 1),
            jnp.asarray(w3, f32).reshape(C_OUT, HIDDEN).T,     # (HIDDEN, 1)
            jnp.asarray(b3, f32).reshape(C_OUT),               # (1,) scalar -> SMEM
            _make_tap_masks())                                 # (TAPS, Q)


# ---------------------------------- forward ------------------------------------
_FLOPS_EST = (2 * B * LATENT * HIDDEN * HW          # FC
              + 2 * 2 * HIDDEN * (TAPS * HIDDEN) * Q  # two 3x3 conv matmuls
              + 2 * HIDDEN * Q)                     # 1x1 head
_BYTES_EST = 4 * (B * LATENT + C_OUT + TAPS * Q + LATENT * HIDDEN * HW
                  + 2 * (HIDDEN * TAPS * HIDDEN + HIDDEN) + HIDDEN * C_OUT + Q)


def conv_decoder_forward(z, packed, tap_shifts=_tap_shifts(like_jnp=True)):
    afc, w1t, b1c, w2t, b2c, w3c, b3s, mask = packed
    kernel = functools.partial(_fused_decoder_kernel, tap_shifts=tap_shifts)
    out_row = pl.pallas_call(
        kernel,
        out_shape=jax.ShapeDtypeStruct((1, Q), jnp.float32),
        # Single grid step: the whole ~19 MFLOP problem runs as one fused step on one
        # TensorCore.
        # TODO(synk): for repeated decoding with fixed weights, keep afc/w* VMEM-resident
        # across calls (cross-call prefetch) or batch many z per call so the ~0.3 MiB
        # weight DMA amortizes; for large B on v7x add a leading "parallel" grid axis
        # over 128-lane output tiles to use the second TensorCore.
        grid=(1,),
        in_specs=[
            pl.BlockSpec(memory_space=pltpu.MemorySpace.SMEM),            # z  (B, LATENT)
            pl.BlockSpec(memory_space=pltpu.MemorySpace.SMEM),            # b3 (1,)
            pl.BlockSpec((TAPS, Q), lambda i: (0, 0)),                    # per-tap masks
            pl.BlockSpec((LATENT, HIDDEN, HW), lambda i: (0, 0, 0)),      # fc weight
            pl.BlockSpec((HIDDEN, TAPS * HIDDEN), lambda i: (0, 0)),      # w1 tap-packed^T
            pl.BlockSpec((HIDDEN, 1), lambda i: (0, 0)),                  # b1 column
            pl.BlockSpec((HIDDEN, TAPS * HIDDEN), lambda i: (0, 0)),      # w2 tap-packed^T
            pl.BlockSpec((HIDDEN, 1), lambda i: (0, 0)),                  # b2 column
            pl.BlockSpec((HIDDEN, C_OUT), lambda i: (0, 0)),              # w3 (1x1 conv)
        ],
        out_specs=pl.BlockSpec((1, Q), lambda i: (0, 0)),
        scratch_shapes=[
            pltpu.VMEM((HIDDEN, Q), jnp.float32),            # FC result X^T (64 KiB)
            pltpu.VMEM((TAPS * HIDDEN, Q), jnp.float32),     # tap-stacked MXU operand X9
        ],
        compiler_params=pltpu.CompilerParams(dimension_semantics=("arbitrary",)),
        cost_estimate=pl.CostEstimate(flops=_FLOPS_EST, transcendentals=0,
                                      bytes_accessed=_BYTES_EST),
    )(z, b3s, mask, afc, w1t, b1c, w2t, b2c, w3c)
    # glue: lane-dense (1, B*H*W) row -> PyTorch (B, H, W) (squeeze(1) path, C_OUT == 1)
    return out_row.reshape(B, H, W)


# -------------------------- pure-JAX reference ----------------------------------
def reference_forward(z, params):
    fc_w, w1, b1, w2, b2, w3, b3 = params
    fc = z @ fc_w.T
    x = fc.reshape(-1, HIDDEN, H, W)

    def conv(x, w, b, pad, act):
        y = jax.lax.conv_general_dilated(
            x, w, (1, 1), pad, dimension_numbers=('NCHW', 'OIHW', 'NCHW'))
        y = y + b[None, :, None, None]
        return jnp.where(y >= 0, y, LRELU_A * y) if act else y

    h = conv(x, w1, b1, 'SAME', True)
    h = conv(h, w2, b2, 'SAME', True)
    h = conv(h, w3, b3, 'VALID', False)
    h = h.reshape(-1, C_OUT, H, W)
    if C_OUT == 1:
        return h[:, 0]
    return jnp.transpose(h, (0, 2, 3, 1))


# ----------------------------------- main ----------------------------------------
if __name__ == "__main__":
    key = jax.random.PRNGKey(0)
    ks = jax.random.split(key, 8)
    z = jax.random.normal(ks[0], (B, LATENT), jnp.float32)
    fc_w = jax.random.normal(ks[1], (HIDDEN * H * W, LATENT), jnp.float32) * 0.1
    w1 = jax.random.normal(ks[2], (HIDDEN, HIDDEN, KH, KW), jnp.float32) * 0.1
    b1 = jax.random.normal(ks[3], (HIDDEN,), jnp.float32) * 0.1
    w2 = jax.random.normal(ks[4], (HIDDEN, HIDDEN, KH, KW), jnp.float32) * 0.1
    b2 = jax.random.normal(ks[5], (HIDDEN,), jnp.float32) * 0.1
    w3 = jax.random.normal(ks[6], (C_OUT, HIDDEN, 1, 1), jnp.float32) * 0.1
    b3 = jax.random.normal(ks[7], (C_OUT,), jnp.float32) * 0.1
    params = (fc_w, w1, b1, w2, b2, w3, b3)

    packed = pack_params(params)                   # one-time weight re-layout (not per-call)

    # One-time setup/unit check of the pltpu.roll convention (kept out of the forward
    # path per review; the resulting shifts are static Python constants).
    tap_shifts = _tap_shifts(_roll_like_jnp())

    out = conv_decoder_forward(z, packed, tap_shifts)
    out = jax.block_until_ready(out)

    ref = reference_forward(z, params)
    assert out.shape == (B, H, W), out.shape
    err = float(jnp.max(jnp.abs(out - ref)))
    assert err < 1e-4, f"kernel/reference mismatch, max abs err = {err}"

    print("KERNEL_OK")
</pallas_src>

<mosaic_0001>
module attributes {stable_mosaic.version = 11 : i64} {
  func.func @_roll_probe_kernel(%arg0: memref<8x256xf32, #tpu.memory_space<vmem>>, %arg1: memref<8x256xf32, #tpu.memory_space<vmem>>) attributes {dimension_semantics = [], scalar_prefetch = 0 : i64, scratch_operands = 0 : i64, tpu.core_type = #tpu.core_type<tc>} {
    %c0 = arith.constant 0 : index
    %c0_0 = arith.constant 0 : index
    %0 = vector.load %arg0[%c0, %c0_0] : memref<8x256xf32, #tpu.memory_space<vmem>>, vector<8x256xf32>
    %c1_i32 = arith.constant 1 : i32
    %1 = tpu.dynamic_rotate %0 by %c1_i32 dim 1 : vector<8x256xf32>, i32 -> vector<8x256xf32>
    %c0_1 = arith.constant 0 : index
    %c0_2 = arith.constant 0 : index
    %2 = vector.load %arg1[%c0_1, %c0_2] : memref<8x256xf32, #tpu.memory_space<vmem>>, vector<8x256xf32>
    tpu.vector_store %arg1[%c0_1, %c0_2], %1 {strides = array<i32>} : memref<8x256xf32, #tpu.memory_space<vmem>>, vector<8x256xf32>,
    return
  }
}

</mosaic_0001>

<llo_original>
// kernel: tpu_custom_call.1
$region0: #{tpu_custom_call.1}
  #allocation0 [shape = 'u32[]', space=smem, size = 0x4, offset = 0x4, fixed_abs, tag = 'smem constant byte address 0x4 - core index']
  #allocation1 [shape = 'u32[72,128]{1,0:T(1,128)}', space=vmem, size = 0x9000, scoped, tag = 'internal scratch']
  %s0 = inlined_call_operand.hbm [shape: f32[8,256], index: 0, kind: input, shape index: {}]
  %s1 = inlined_call_operand.hbm [shape: f32[8,256], index: 1, kind: output, shape index: {}]
  %s2 = sld [smem:[#allocation0]]
  $region18: #{tpu_custom_call.1} parent=0
    _
  %s4 = ssub.s32 1, %s2
  %s5 = scalar_select 0, %s4, %s2
  $region1: #{tpu_custom_call.1} parent=0
    #allocation2 [shape = 'u8[8192]{0}', space=vmem, size = 0x2000, scoped, tag = 'input window, operand 0, single buffered']
    #allocation3 [shape = 's32[1]{0}', space=sflag, size = 0x4, scoped, tag = 'scoped memory for tpu_custom_call.1']
    #allocation4 [shape = 's32[1]{0}', space=sflag, size = 0x4, scoped, tag = 'scoped memory for tpu_custom_call.1']
    #allocation5 [shape = 'u8[8192]{0}', space=vmem, size = 0x2000, scoped, tag = 'output window, operand 0, single buffered']
    %6 = vsyncpa [#allocation3], 0
    %7 = vsyncpa [#allocation4], 0
    // Predicated region
    $region2: #{tpu_custom_call.1} parent=1 // pred_check
      _
    $region3: #{tpu_custom_call.1} parent=1 // pred_check_branch
      %9 = sbr.rel (0) target = $region5
    $region4: #{tpu_custom_call.1} parent=1 // pred_region
      %11 = vsyncadd [#allocation3], 0
      %s13 = sshll.u32 %s0, 4
      %s14 = int_to_ptr.hbm [resolvable:$true] %s13
      %s15 = sshll.u32 [#allocation2], 4
      %s16 = int_to_ptr.vmem [resolvable:$true] %s15
      %18 = dma.hbm_to_vmem [thread:$0]  %s14, 256, %s16, [#allocation3]
    $region5: #{tpu_custom_call.1} parent=1 // pred_fallthru
      _
    // Predicated region
    $region6: #{tpu_custom_call.1} parent=1 // pred_check
      _
    $region7: #{tpu_custom_call.1} parent=1 // pred_check_branch
      %20 = sbr.rel (0) target = $region9
    $region8: #{tpu_custom_call.1} parent=1 // pred_region
      %22 = dma.done [#allocation3], 256
    $region9: #{tpu_custom_call.1} parent=1 // pred_fallthru
      _
    %v23 = vld [vmem:[#allocation2] sm:$0xff]
    %v24 = vld [vmem:[#allocation2 + $0x8] sm:$0xff]
    %25 = vrot.lane.b32.xlu0 %v23, 1
    %v26 = vpop.permute.xlu0 %25
    %27 = vrot.lane.b32.xlu0 %v24, 1
    %v28 = vpop.permute.xlu0 %27
    %v29 = vlaneseq
    %v30 = vand.u32 %v29, 127
    %vm31 = vcmp.lt.s32.totalorder %v30, 1
    %v32 = vsel %vm31, %v26, %v28
    %v33 = vsel %vm31, %v28, %v26
    %34 = vst [vmem:[#allocation5] sm:$0xff] %v33
    %35 = vst [vmem:[#allocation5 + $0x8] sm:$0xff] %v32
    // Predicated region
    $region10: #{tpu_custom_call.1} parent=1 // pred_check
      _
    $region11: #{tpu_custom_call.1} parent=1 // pred_check_branch
      %37 = sbr.rel (0) target = $region13
    $region12: #{tpu_custom_call.1} parent=1 // pred_region
      %39 = vsyncadd [#allocation4], 0
      %s41 = sshll.u32 [#allocation5], 4
      %s42 = int_to_ptr.vmem [resolvable:$true] %s41
      %s43 = sshll.u32 %s1, 4
      %s44 = int_to_ptr.hbm [resolvable:$true] %s43
      %46 = dma.vmem_to_hbm [thread:$0]  %s42, 256, %s44, [#allocation4]
    $region13: #{tpu_custom_call.1} parent=1 // pred_fallthru
      _
    // Predicated region
    $region14: #{tpu_custom_call.1} parent=1 // pred_check
      _
    $region15: #{tpu_custom_call.1} parent=1 // pred_check_branch
      %48 = sbr.rel (0) target = $region17
    $region16: #{tpu_custom_call.1} parent=1 // pred_region
      %50 = dma.done [#allocation4], 256
    $region17: #{tpu_custom_call.1} parent=1 // pred_fallthru
      _
    %51 = vsyncpa [#allocation3], 1
    %52 = vsyncpa [#allocation4], 1

</llo_original>
